<compile_context>
chip_gen: v6e
topology: v6e:2x2x1
jax: 0.10.0
libtpu: 0.0.40
codegen_flags: <defaults>
</compile_context>

<pallas_src>
import functools
import math

import jax
import jax.numpy as jnp
from jax.experimental import pallas as pl
from jax.experimental.pallas import tpu as pltpu


def _round_up(x, m):
    return (x + m - 1) // m * m


# ---------------------------------------------------------------------------
# Fused kernel:  out = (relu(x @ w2 + b2)) @ w3 + b3
# All operands are VMEM tiles; the hidden activation lives only in vregs.
# ---------------------------------------------------------------------------
def _fused_mlp_kernel(x_ref, w2_ref, b2_ref, w3_ref, b3_ref, o_ref):
    # Layer 2: x @ w2 + b2, ReLU.  f32 operands, f32 MXU accumulation.
    h = jnp.dot(x_ref[...], w2_ref[...], preferred_element_type=jnp.float32)
    h = jnp.maximum(h + b2_ref[...], 0.0)
    # Layer 3: h @ w3 + b3 (no activation).
    y = jnp.dot(h, w3_ref[...], preferred_element_type=jnp.float32)
    o_ref[...] = (y + b3_ref[...]).astype(o_ref.dtype)


def _fused_mlp(x_p, w2_p, b2_p, w3_p, b3_p, *, tm):
    """x_p:(Mp,Kp)  w2_p:(Kp,N2)  b2_p:(1,N2)  w3_p:(N2,N3)  b3_p:(1,N3)."""
    Mp, Kp = x_p.shape
    _, N2 = w2_p.shape
    _, N3 = w3_p.shape
    grid = (Mp // tm,)

    return pl.pallas_call(
        _fused_mlp_kernel,
        out_shape=jax.ShapeDtypeStruct((Mp, N3), jnp.float32),
        grid_spec=pltpu.PrefetchScalarGridSpec(
            num_scalar_prefetch=0,
            grid=grid,
            in_specs=[
                pl.BlockSpec((tm, Kp), lambda i: (i, 0)),   # x tile (per grid step)
                pl.BlockSpec((Kp, N2), lambda i: (0, 0)),   # w2 (resident)
                pl.BlockSpec((1, N2), lambda i: (0, 0)),    # b2 (resident)
                pl.BlockSpec((N2, N3), lambda i: (0, 0)),   # w3 (resident)
                pl.BlockSpec((1, N3), lambda i: (0, 0)),    # b3 (resident)
            ],
            out_specs=pl.BlockSpec((tm, N3), lambda i: (i, 0)),
        ),
        compiler_params=pltpu.CompilerParams(
            dimension_semantics=("parallel",),
        ),
    )(x_p, w2_p, b2_p, w3_p, b3_p)


# ---------------------------------------------------------------------------
# Parameters: PyTorch nn.Linear default init, stored (in, out), zero-padded to
# lane-dense shapes ONCE at init time (no per-forward pad/cast ops).
# ---------------------------------------------------------------------------
def _linear_params(key, fan_in, fan_out, pad_in, pad_out):
    kw, kb = jax.random.split(key)
    stdv = 1.0 / math.sqrt(fan_in)
    w = jax.random.uniform(kw, (fan_in, fan_out), jnp.float32, -stdv, stdv)
    b = jax.random.uniform(kb, (fan_out,), jnp.float32, -stdv, stdv)
    w_p = jnp.pad(w, ((0, pad_in - fan_in), (0, pad_out - fan_out)))
    b_p = jnp.pad(b, (0, pad_out - fan_out)).reshape(1, pad_out)
    return w_p, b_p


def init_params(key, input_shape, out_dim):
    # The reference forward applies fc2 directly to x, so input_shape must be 200.
    assert input_shape == 200, "TwoHiddenLayerFc.forward requires input_shape == 200"
    k1, k2, k3 = jax.random.split(key, 3)
    kp_in = _round_up(input_shape, 128)   # 256
    kp_h = _round_up(200, 128)            # 256
    kp_out = _round_up(out_dim, 128)
    # fc1 is dead in the reference forward (its result is discarded); keep its
    # parameters for module fidelity but never launch a kernel for it.
    w1, b1 = _linear_params(k1, input_shape, 200, kp_in, kp_h)
    w2, b2 = _linear_params(k2, 200, 200, kp_in, kp_h)
    w3, b3 = _linear_params(k3, 200, out_dim, kp_h, kp_out)
    return dict(w1=w1, b1=b1, w2=w2, b2=b2, w3=w3, b3=b3)


# ---------------------------------------------------------------------------
# Forward pass (jit-compiled; dead fc1 elided, fc2+ReLU+fc3 fused)
# ---------------------------------------------------------------------------
@functools.partial(jax.jit, static_argnames=("out_dim",))
def two_hidden_layer_fc(params, x, *, out_dim):
    M, K = x.shape
    Kp = params["w2"].shape[0]
    # Sublane-align the batch dim; use 128-row tiles once the batch is big
    # enough to be worth splitting across TensorCores.
    tm = 128 if M >= 128 else _round_up(M, 8)
    Mp = _round_up(M, tm)
    x_p = jnp.pad(x.astype(jnp.float32), ((0, Mp - M), (0, Kp - K)))
    out_p = _fused_mlp(
        x_p, params["w2"], params["b2"], params["w3"], params["b3"], tm=tm
    )
    return out_p[:M, :out_dim]


if __name__ == "__main__":
    key = jax.random.PRNGKey(0)
    kx, kp = jax.random.split(key)

    batch, input_shape, out_dim = 2, 200, 64
    x = jax.random.normal(kx, (batch, input_shape), jnp.float32)
    params = init_params(kp, input_shape, out_dim)

    out = two_hidden_layer_fc(params, x, out_dim=out_dim)
    out = jax.block_until_ready(out)

    # Pure-JAX reference on the unpadded weights (recovered by slicing the
    # zero-padded stored weights).
    w2 = params["w2"][:input_shape, :200]
    b2 = params["b2"][0, :200]
    w3 = params["w3"][:200, :out_dim]
    b3 = params["b3"][0, :out_dim]
    ref = jnp.maximum(x @ w2 + b2, 0.0) @ w3 + b3

    assert out.shape == (batch, out_dim), out.shape
    assert bool(jnp.all(jnp.isfinite(out)))
    assert bool(jnp.allclose(out, ref, rtol=5e-2, atol=5e-2))
    print("KERNEL_OK")
</pallas_src>

<mosaic_0001>
module attributes {stable_mosaic.version = 11 : i64} {
  func.func @_fused_mlp_kernel(%arg0: i32, %arg1: memref<8x256xf32, #tpu.memory_space<vmem>>, %arg2: memref<256x256xf32, #tpu.memory_space<vmem>>, %arg3: memref<1x256xf32, #tpu.memory_space<vmem>>, %arg4: memref<256x128xf32, #tpu.memory_space<vmem>>, %arg5: memref<1x128xf32, #tpu.memory_space<vmem>>, %arg6: memref<8x128xf32, #tpu.memory_space<vmem>>) attributes {dimension_semantics = [#tpu.dimension_semantics<parallel>], iteration_bounds = array<i64: 1>, scalar_prefetch = 0 : i64, scratch_operands = 0 : i64, tpu.core_type = #tpu.core_type<tc>, window_params = [{transform_indices = @transform_0, window_bounds = array<i64: 8, 256>}, {pipeline_mode = #tpu.pipeline_mode<synchronous>, transform_indices = @transform_1, window_bounds = array<i64: 256, 256>}, {pipeline_mode = #tpu.pipeline_mode<synchronous>, transform_indices = @transform_2, window_bounds = array<i64: 1, 256>}, {pipeline_mode = #tpu.pipeline_mode<synchronous>, transform_indices = @transform_3, window_bounds = array<i64: 256, 128>}, {pipeline_mode = #tpu.pipeline_mode<synchronous>, transform_indices = @transform_4, window_bounds = array<i64: 1, 128>}, {transform_indices = @transform_5, window_bounds = array<i64: 8, 128>}]} {
    %c0 = arith.constant 0 : index
    %c0_0 = arith.constant 0 : index
    %0 = vector.load %arg1[%c0, %c0_0] : memref<8x256xf32, #tpu.memory_space<vmem>>, vector<8x256xf32>
    %c0_1 = arith.constant 0 : index
    %c0_2 = arith.constant 0 : index
    %1 = vector.load %arg2[%c0_1, %c0_2] : memref<256x256xf32, #tpu.memory_space<vmem>>, vector<256x256xf32>
    %cst = arith.constant dense<0.000000e+00> : vector<8x256xf32>
    %2 = tpu.matmul %0, %1, %cst {dimension_numbers = #tpu.dot_dimension_numbers<[1], [0], [0], [1], [0, 0, 1, 1], [], []>} : vector<8x256xf32>, vector<256x256xf32>, vector<8x256xf32> -> vector<8x256xf32>
    %c0_3 = arith.constant 0 : index
    %c0_4 = arith.constant 0 : index
    %3 = vector.load %arg3[%c0_3, %c0_4] : memref<1x256xf32, #tpu.memory_space<vmem>>, vector<1x256xf32>
    %4 = vector.broadcast %3 : vector<1x256xf32> to vector<8x256xf32>
    %5 = arith.addf %2, %4 : vector<8x256xf32>
    %cst_5 = arith.constant 0.000000e+00 : f32
    %6 = vector.broadcast %cst_5 : f32 to vector<8x256xf32>
    %7 = arith.maximumf %5, %6 : vector<8x256xf32>
    %c0_6 = arith.constant 0 : index
    %c0_7 = arith.constant 0 : index
    %8 = vector.load %arg4[%c0_6, %c0_7] : memref<256x128xf32, #tpu.memory_space<vmem>>, vector<256x128xf32>
    %cst_8 = arith.constant dense<0.000000e+00> : vector<8x128xf32>
    %9 = tpu.matmul %7, %8, %cst_8 {dimension_numbers = #tpu.dot_dimension_numbers<[1], [0], [0], [1], [0, 0, 1, 1], [], []>} : vector<8x256xf32>, vector<256x128xf32>, vector<8x128xf32> -> vector<8x128xf32>
    %c0_9 = arith.constant 0 : index
    %c0_10 = arith.constant 0 : index
    %10 = vector.load %arg5[%c0_9, %c0_10] : memref<1x128xf32, #tpu.memory_space<vmem>>, vector<1x128xf32>
    %11 = vector.broadcast %10 : vector<1x128xf32> to vector<8x128xf32>
    %12 = arith.addf %9, %11 : vector<8x128xf32>
    %c0_11 = arith.constant 0 : index
    %c0_12 = arith.constant 0 : index
    %13 = vector.load %arg6[%c0_11, %c0_12] : memref<8x128xf32, #tpu.memory_space<vmem>>, vector<8x128xf32>
    tpu.vector_store %arg6[%c0_11, %c0_12], %12 {strides = array<i32>} : memref<8x128xf32, #tpu.memory_space<vmem>>, vector<8x128xf32>,
    return
  }
  func.func @transform_0(%arg0: i32) -> (i32, i32) {
    %c0_i32 = arith.constant 0 : i32
    %c0_i32_0 = arith.constant 0 : i32
    return %arg0, %c0_i32 : i32, i32
  }
  func.func @transform_1(%arg0: i32) -> (i32, i32) {
    %c0_i32 = arith.constant 0 : i32
    %c0_i32_0 = arith.constant 0 : i32
    %c0_i32_1 = arith.constant 0 : i32
    return %c0_i32, %c0_i32_0 : i32, i32
  }
  func.func @transform_2(%arg0: i32) -> (i32, i32) {
    %c0_i32 = arith.constant 0 : i32
    %c0_i32_0 = arith.constant 0 : i32
    %c0_i32_1 = arith.constant 0 : i32
    return %c0_i32, %c0_i32_0 : i32, i32
  }
  func.func @transform_3(%arg0: i32) -> (i32, i32) {
    %c0_i32 = arith.constant 0 : i32
    %c0_i32_0 = arith.constant 0 : i32
    %c0_i32_1 = arith.constant 0 : i32
    return %c0_i32, %c0_i32_0 : i32, i32
  }
  func.func @transform_4(%arg0: i32) -> (i32, i32) {
    %c0_i32 = arith.constant 0 : i32
    %c0_i32_0 = arith.constant 0 : i32
    %c0_i32_1 = arith.constant 0 : i32
    return %c0_i32, %c0_i32_0 : i32, i32
  }
  func.func @transform_5(%arg0: i32) -> (i32, i32) {
    %c0_i32 = arith.constant 0 : i32
    %c0_i32_0 = arith.constant 0 : i32
    return %arg0, %c0_i32 : i32, i32
  }
}

</mosaic_0001>

<llo_original>
// kernel: two_hidden_layer_fc.1
$region0: #{two_hidden_layer_fc.1}
  #allocation0 [shape = 'u32[]', space=smem, size = 0x4, offset = 0x4, fixed_abs, tag = 'smem constant byte address 0x4 - core index']
  #allocation1 [shape = 'u32[144,128]{1,0:T(1,128)}', space=vmem, size = 0x12000, scoped, tag = 'internal scratch']
  %s0 = inlined_call_operand.vmem [shape: f32[8,256], index: 0, kind: input, shape index: {}]
  %s1 = inlined_call_operand.hbm [shape: f32[256,256], index: 1, kind: input, shape index: {}]
  %s2 = inlined_call_operand.vmem [shape: f32[1,256], index: 2, kind: input, shape index: {}]
  %s3 = inlined_call_operand.hbm [shape: f32[256,128], index: 3, kind: input, shape index: {}]
  %s4 = inlined_call_operand.vmem [shape: f32[1,128], index: 4, kind: input, shape index: {}]
  %s5 = inlined_call_operand.vmem [shape: f32[8,128], index: 5, kind: output, shape index: {}]
  %s6 = sld [smem:[#allocation0]]
  $region38: #{two_hidden_layer_fc.1} parent=0
    _
  %s8 = ssub.s32 1, %s6
  %s9 = scalar_select 0, %s8, %s6
  $region1: #{two_hidden_layer_fc.1} parent=0
    #allocation2 [shape = 'u8[262144]{0}', space=vmem, size = 0x40000, scoped, tag = 'input window, operand 1, single buffered']
    #allocation3 [shape = 's32[1]{0}', space=sflag, size = 0x4, scoped, tag = 'scoped memory for two_hidden_layer_fc.1']
    #allocation4 [shape = 'u8[131072]{0}', space=vmem, size = 0x20000, scoped, tag = 'input window, operand 3, single buffered']
    #allocation5 [shape = 's32[1]{0}', space=sflag, size = 0x4, scoped, tag = 'scoped memory for two_hidden_layer_fc.1']
    %10 = vsyncpa [#allocation3], 0
    %11 = vsyncpa [#allocation5], 0
    // Predicated region
    $region2: #{two_hidden_layer_fc.1} parent=1 // pred_check
      _
    $region3: #{two_hidden_layer_fc.1} parent=1 // pred_check_branch
      %13 = sbr.rel (0) target = $region5
    $region4: #{two_hidden_layer_fc.1} parent=1 // pred_region
      _
    $region5: #{two_hidden_layer_fc.1} parent=1 // pred_fallthru
      _
    // Predicated region
    $region6: #{two_hidden_layer_fc.1} parent=1 // pred_check
      _
    $region7: #{two_hidden_layer_fc.1} parent=1 // pred_check_branch
      %15 = sbr.rel (0) target = $region9
    $region8: #{two_hidden_layer_fc.1} parent=1 // pred_region
      %s17 = ssub.s32 8192, 8192
      %18 = vsyncadd [#allocation3], %s17
      %s19 = sshll.u32 [#allocation2], 4
      %s20 = int_to_ptr.vmem [resolvable:$true] %s19
      %25 = dma.hbm_to_vmem [thread:$0]  %s1, 8192, %s20, [#allocation3], 256, 256, 16
    $region9: #{two_hidden_layer_fc.1} parent=1 // pred_fallthru
      _
    // Predicated region
    $region10: #{two_hidden_layer_fc.1} parent=1 // pred_check
      _
    $region11: #{two_hidden_layer_fc.1} parent=1 // pred_check_branch
      %27 = sbr.rel (0) target = $region13
    $region12: #{two_hidden_layer_fc.1} parent=1 // pred_region
      _
    $region13: #{two_hidden_layer_fc.1} parent=1 // pred_fallthru
      _
    // Predicated region
    $region14: #{two_hidden_layer_fc.1} parent=1 // pred_check
      _
    $region15: #{two_hidden_layer_fc.1} parent=1 // pred_check_branch
      %29 = sbr.rel (0) target = $region17
    $region16: #{two_hidden_layer_fc.1} parent=1 // pred_region
      %s31 = ssub.s32 4096, 4096
      %32 = vsyncadd [#allocation5], %s31
      %s33 = sshll.u32 [#allocation4], 4
      %s34 = int_to_ptr.vmem [resolvable:$true] %s33
      %39 = dma.hbm_to_vmem [thread:$0]  %s3, 4096, %s34, [#allocation5], 128, 128, 8
    $region17: #{two_hidden_layer_fc.1} parent=1 // pred_fallthru
      _
    // Predicated region
    $region18: #{two_hidden_layer_fc.1} parent=1 // pred_check
      _
    $region19: #{two_hidden_layer_fc.1} parent=1 // pred_check_branch
      %41 = sbr.rel (0) target = $region21
    $region20: #{two_hidden_layer_fc.1} parent=1 // pred_region
      _
    $region21: #{two_hidden_layer_fc.1} parent=1 // pred_fallthru
      _
    // Predicated region
    $region22: #{two_hidden_layer_fc.1} parent=1 // pred_check
      _
    $region23: #{two_hidden_layer_fc.1} parent=1 // pred_check_branch
      %43 = sbr.rel (0) target = $region25
    $region24: #{two_hidden_layer_fc.1} parent=1 // pred_region
      %44 = dma.done [#allocation3], 8192
    $region25: #{two_hidden_layer_fc.1} parent=1 // pred_fallthru
      _
    // Predicated region
    $region26: #{two_hidden_layer_fc.1} parent=1 // pred_check
      _
    $region27: #{two_hidden_layer_fc.1} parent=1 // pred_check_branch
      %46 = sbr.rel (0) target = $region29
    $region28: #{two_hidden_layer_fc.1} parent=1 // pred_region
      %47 = dma.done [#allocation5], 4096
    $region29: #{two_hidden_layer_fc.1} parent=1 // pred_fallthru
      _
    %v48 = vld [vmem:[%s0] sm:$0xff]
    %v49 = vld [vmem:[%s0 + $0x8] sm:$0xff]
    %v50 = vld [vmem:[#allocation2] sm:$0xff]
    %v51 = vld [vmem:[#allocation2 + $0x8] sm:$0xff]
    %v52 = vld [vmem:[#allocation2 + $0x10] sm:$0xff]
    %v53 = vld [vmem:[#allocation2 + $0x18] sm:$0xff]
    %v54 = vld [vmem:[#allocation2 + $0x20] sm:$0xff]
    %v55 = vld [vmem:[#allocation2 + $0x28] sm:$0xff]
    %v56 = vld [vmem:[#allocation2 + $0x30] sm:$0xff]
    %v57 = vld [vmem:[#allocation2 + $0x38] sm:$0xff]
    %v58 = vld [vmem:[#allocation2 + $0x40] sm:$0xff]
    %v59 = vld [vmem:[#allocation2 + $0x48] sm:$0xff]
    %v60 = vld [vmem:[#allocation2 + $0x50] sm:$0xff]
    %v61 = vld [vmem:[#allocation2 + $0x58] sm:$0xff]
    %v62 = vld [vmem:[#allocation2 + $0x60] sm:$0xff]
    %v63 = vld [vmem:[#allocation2 + $0x68] sm:$0xff]
    %v64 = vld [vmem:[#allocation2 + $0x70] sm:$0xff]
    %v65 = vld [vmem:[#allocation2 + $0x78] sm:$0xff]
    %v66 = vld [vmem:[#allocation2 + $0x80] sm:$0xff]
    %v67 = vld [vmem:[#allocation2 + $0x88] sm:$0xff]
    %v68 = vld [vmem:[#allocation2 + $0x90] sm:$0xff]
    %v69 = vld [vmem:[#allocation2 + $0x98] sm:$0xff]
    %v70 = vld [vmem:[#allocation2 + $0xa0] sm:$0xff]
    %v71 = vld [vmem:[#allocation2 + $0xa8] sm:$0xff]
    %v72 = vld [vmem:[#allocation2 + $0xb0] sm:$0xff]
    %v73 = vld [vmem:[#allocation2 + $0xb8] sm:$0xff]
    %v74 = vld [vmem:[#allocation2 + $0xc0] sm:$0xff]
    %v75 = vld [vmem:[#allocation2 + $0xc8] sm:$0xff]
    %v76 = vld [vmem:[#allocation2 + $0xd0] sm:$0xff]
    %v77 = vld [vmem:[#allocation2 + $0xd8] sm:$0xff]
    %v78 = vld [vmem:[#allocation2 + $0xe0] sm:$0xff]
    %v79 = vld [vmem:[#allocation2 + $0xe8] sm:$0xff]
    %v80 = vld [vmem:[#allocation2 + $0xf0] sm:$0xff]
    %v81 = vld [vmem:[#allocation2 + $0xf8] sm:$0xff]
    %v82 = vld [vmem:[#allocation2 + $0x100] sm:$0xff]
    %v83 = vld [vmem:[#allocation2 + $0x108] sm:$0xff]
    %v84 = vld [vmem:[#allocation2 + $0x110] sm:$0xff]
    %v85 = vld [vmem:[#allocation2 + $0x118] sm:$0xff]
    %v86 = vld [vmem:[#allocation2 + $0x120] sm:$0xff]
    %v87 = vld [vmem:[#allocation2 + $0x128] sm:$0xff]
    %v88 = vld [vmem:[#allocation2 + $0x130] sm:$0xff]
    %v89 = vld [vmem:[#allocation2 + $0x138] sm:$0xff]
    %v90 = vld [vmem:[#allocation2 + $0x140] sm:$0xff]
    %v91 = vld [vmem:[#allocation2 + $0x148] sm:$0xff]
    %v92 = vld [vmem:[#allocation2 + $0x150] sm:$0xff]
    %v93 = vld [vmem:[#allocation2 + $0x158] sm:$0xff]
    %v94 = vld [vmem:[#allocation2 + $0x160] sm:$0xff]
    %v95 = vld [vmem:[#allocation2 + $0x168] sm:$0xff]
    %v96 = vld [vmem:[#allocation2 + $0x170] sm:$0xff]
    %v97 = vld [vmem:[#allocation2 + $0x178] sm:$0xff]
    %v98 = vld [vmem:[#allocation2 + $0x180] sm:$0xff]
    %v99 = vld [vmem:[#allocation2 + $0x188] sm:$0xff]
    %v100 = vld [vmem:[#allocation2 + $0x190] sm:$0xff]
    %v101 = vld [vmem:[#allocation2 + $0x198] sm:$0xff]
    %v102 = vld [vmem:[#allocation2 + $0x1a0] sm:$0xff]
    %v103 = vld [vmem:[#allocation2 + $0x1a8] sm:$0xff]
    %v104 = vld [vmem:[#allocation2 + $0x1b0] sm:$0xff]
    %v105 = vld [vmem:[#allocation2 + $0x1b8] sm:$0xff]
    %v106 = vld [vmem:[#allocation2 + $0x1c0] sm:$0xff]
    %v107 = vld [vmem:[#allocation2 + $0x1c8] sm:$0xff]
    %v108 = vld [vmem:[#allocation2 + $0x1d0] sm:$0xff]
    %v109 = vld [vmem:[#allocation2 + $0x1d8] sm:$0xff]
    %v110 = vld [vmem:[#allocation2 + $0x1e0] sm:$0xff]
    %v111 = vld [vmem:[#allocation2 + $0x1e8] sm:$0xff]
    %v112 = vld [vmem:[#allocation2 + $0x1f0] sm:$0xff]
    %v113 = vld [vmem:[#allocation2 + $0x1f8] sm:$0xff]
    %v114 = vld [vmem:[%s2] sm:$0x3]
    %v116 = vlaneseq
    %v117 = vshrl.u32 %v116, 7
    %v118 = vsub.s32 0, %v117
    %v119 = vrot.slane %v114, %v118
    %v120 = vlaneseq
    %v121 = vshrl.u32 %v120, 7
    %v122 = vsub.s32 1, %v121
    %v123 = vrot.slane %v114, %v122
    %126 = vmatprep.subr.mxu0 %v81
    %127 = vmatpush1.msra.mxu0 %v80
    %128 = vmatprep.subr.mxu0 %v79
    %129 = vmatpush1.msra.mxu0 %v78
    %130 = vmatprep.subr.mxu0 %v77
    %131 = vmatpush1.msra.mxu0 %v76
    %132 = vmatprep.subr.mxu0 %v75
    %133 = vmatpush1.msra.mxu0 %v74
    %134 = vmatprep.subr.mxu0 %v73
    %135 = vmatpush1.msra.mxu0 %v72
    %136 = vmatprep.subr.mxu0 %v71
    %137 = vmatpush1.msra.mxu0 %v70
    %138 = vmatprep.subr.mxu0 %v69
    %139 = vmatpush1.msra.mxu0 %v68
    %140 = vmatprep.subr.mxu0 %v67
    %141 = vmatpush1.msra.mxu0 %v66
    %142 = vmatprep.subr.mxu0 %v65
    %143 = vmatpush1.msra.mxu0 %v64
    %144 = vmatprep.subr.mxu0 %v63
    %145 = vmatpush1.msra.mxu0 %v62
    %146 = vmatprep.subr.mxu0 %v61
    %147 = vmatpush1.msra.mxu0 %v60
    %148 = vmatprep.subr.mxu0 %v59
    %149 = vmatpush1.msra.mxu0 %v58
    %150 = vmatprep.subr.mxu0 %v57
    %151 = vmatpush1.msra.mxu0 %v56
    %152 = vmatprep.subr.mxu0 %v55
    %153 = vmatpush1.msra.mxu0 %v54
    %154 = vmatprep.subr.mxu0 %v53
    %155 = vmatpush1.msra.mxu0 %v52
    %156 = vmatprep.subr.mxu0 %v51
    %157 = vmatpush1.msra.mxu0 %v50
    %158 = vmatprep.subr.mxu0 %v113
    %159 = vmatpush2.msra.mxu0 %v112
    %160 = vmatprep.subr.mxu0 %v111
    %161 = vmatpush2.msra.mxu0 %v110
    %162 = vmatprep.subr.mxu0 %v109
    %163 = vmatpush2.msra.mxu0 %v108
    %164 = vmatprep.subr.mxu0 %v107
    %165 = vmatpush2.msra.mxu0 %v106
    %166 = vmatprep.subr.mxu0 %v105
    %167 = vmatpush2.msra.mxu0 %v104
    %168 = vmatprep.subr.mxu0 %v103
    %169 = vmatpush2.msra.mxu0 %v102
    %170 = vmatprep.subr.mxu0 %v101
    %171 = vmatpush2.msra.mxu0 %v100
    %172 = vmatprep.subr.mxu0 %v99
    %173 = vmatpush2.msra.mxu0 %v98
    %174 = vmatprep.subr.mxu0 %v97
    %175 = vmatpush2.msra.mxu0 %v96
    %176 = vmatprep.subr.mxu0 %v95
    %177 = vmatpush2.msra.mxu0 %v94
    %178 = vmatprep.subr.mxu0 %v93
    %179 = vmatpush2.msra.mxu0 %v92
    %180 = vmatprep.subr.mxu0 %v91
    %181 = vmatpush2.msra.mxu0 %v90
    %182 = vmatprep.subr.mxu0 %v89
    %183 = vmatpush2.msra.mxu0 %v88
    %184 = vmatprep.subr.mxu0 %v87
    %185 = vmatpush2.msra.mxu0 %v86
    %186 = vmatprep.subr.mxu0 %v85
    %187 = vmatpush2.msra.mxu0 %v84
    %188 = vmatprep.subr.mxu0 %v83
    %189 = vmatpush2.msra.mxu0 %v82
    %190 = vmatprep.mubr.f32.mxu0 %v49
    %191 = vmatmul.mubr.f32.gmra.mxu0 %v48
    %v192 = vpop.f32.mrf.mxu0
    %v193 = vadd.f32 %v119, %v192
    %v194 = vpop.f32.mrf.mxu0
    %v195 = vadd.f32 %v123, %v194
    %196 = vdwg.mxu0
    %v197 = vmax.f32 %v193, 0.0
    %v198 = vmax.f32 %v195, 0.0
    %v199 = vld [vmem:[#allocation4] sm:$0xff]
    %v200 = vld [vmem:[#allocation4 + $0x8] sm:$0xff]
    %v201 = vld [vmem:[#allocation4 + $0x10] sm:$0xff]
    %v202 = vld [vmem:[#allocation4 + $0x18] sm:$0xff]
    %v203 = vld [vmem:[#allocation4 + $0x20] sm:$0xff]
    %v204 = vld [vmem:[#allocation4 + $0x28] sm:$0xff]
    %v205 = vld [vmem:[#allocation4 + $0x30] sm:$0xff]
    %v206 = vld [vmem:[#allocation4 + $0x38] sm:$0xff]
    %v207 = vld [vmem:[#allocation4 + $0x40] sm:$0xff]
    %v208 = vld [vmem:[#allocation4 + $0x48] sm:$0xff]
    %v209 = vld [vmem:[#allocation4 + $0x50] sm:$0xff]
    %v210 = vld [vmem:[#allocation4 + $0x58] sm:$0xff]
    %v211 = vld [vmem:[#allocation4 + $0x60] sm:$0xff]
    %v212 = vld [vmem:[#allocation4 + $0x68] sm:$0xff]
    %v213 = vld [vmem:[#allocation4 + $0x70] sm:$0xff]
    %v214 = vld [vmem:[#allocation4 + $0x78] sm:$0xff]
    %v215 = vld [vmem:[#allocation4 + $0x80] sm:$0xff]
    %v216 = vld [vmem:[#allocation4 + $0x88] sm:$0xff]
    %v217 = vld [vmem:[#allocation4 + $0x90] sm:$0xff]
    %v218 = vld [vmem:[#allocation4 + $0x98] sm:$0xff]
    %v219 = vld [vmem:[#allocation4 + $0xa0] sm:$0xff]
    %v220 = vld [vmem:[#allocation4 + $0xa8] sm:$0xff]
    %v221 = vld [vmem:[#allocation4 + $0xb0] sm:$0xff]
    %v222 = vld [vmem:[#allocation4 + $0xb8] sm:$0xff]
    %v223 = vld [vmem:[#allocation4 + $0xc0] sm:$0xff]
    %v224 = vld [vmem:[#allocation4 + $0xc8] sm:$0xff]
    %v225 = vld [vmem:[#allocation4 + $0xd0] sm:$0xff]
    %v226 = vld [vmem:[#allocation4 + $0xd8] sm:$0xff]
    %v227 = vld [vmem:[#allocation4 + $0xe0] sm:$0xff]
    %v228 = vld [vmem:[#allocation4 + $0xe8] sm:$0xff]
    %v229 = vld [vmem:[#allocation4 + $0xf0] sm:$0xff]
    %v230 = vld [vmem:[#allocation4 + $0xf8] sm:$0xff]
    %v231 = vld [vmem:[%s4] sm:$0x1]
    %v233 = vlaneseq
    %v234 = vshrl.u32 %v233, 7
    %v235 = vsub.s32 0, %v234
    %v236 = vrot.slane %v231, %v235
    %238 = vmatprep.subr.mxu0 0.0
    %239 = vmatpush1.msra.mxu0 %v214
    %240 = vmatprep.subr.mxu0 0.0
    %241 = vmatpush1.msra.mxu0 %v213
    %242 = vmatprep.subr.mxu0 0.0
    %243 = vmatpush1.msra.mxu0 %v212
    %244 = vmatprep.subr.mxu0 0.0
    %245 = vmatpush1.msra.mxu0 %v211
    %246 = vmatprep.subr.mxu0 0.0
    %247 = vmatpush1.msra.mxu0 %v210
    %248 = vmatprep.subr.mxu0 0.0
    %249 = vmatpush1.msra.mxu0 %v209
    %250 = vmatprep.subr.mxu0 0.0
    %251 = vmatpush1.msra.mxu0 %v208
    %252 = vmatprep.subr.mxu0 0.0
    %253 = vmatpush1.msra.mxu0 %v207
    %254 = vmatprep.subr.mxu0 0.0
    %255 = vmatpush1.msra.mxu0 %v206
    %256 = vmatprep.subr.mxu0 0.0
    %257 = vmatpush1.msra.mxu0 %v205
    %258 = vmatprep.subr.mxu0 0.0
    %259 = vmatpush1.msra.mxu0 %v204
    %260 = vmatprep.subr.mxu0 0.0
    %261 = vmatpush1.msra.mxu0 %v203
    %262 = vmatprep.subr.mxu0 0.0
    %263 = vmatpush1.msra.mxu0 %v202
    %264 = vmatprep.subr.mxu0 0.0
    %265 = vmatpush1.msra.mxu0 %v201
    %266 = vmatprep.subr.mxu0 0.0
    %267 = vmatpush1.msra.mxu0 %v200
    %268 = vmatprep.subr.mxu0 0.0
    %269 = vmatpush1.msra.mxu0 %v199
    %270 = vmatprep.subr.mxu0 0.0
    %271 = vmatpush2.msra.mxu0 %v230
    %272 = vmatprep.subr.mxu0 0.0
    %273 = vmatpush2.msra.mxu0 %v229
    %274 = vmatprep.subr.mxu0 0.0
    %275 = vmatpush2.msra.mxu0 %v228
    %276 = vmatprep.subr.mxu0 0.0
    %277 = vmatpush2.msra.mxu0 %v227
    %278 = vmatprep.subr.mxu0 0.0
    %279 = vmatpush2.msra.mxu0 %v226
    %280 = vmatprep.subr.mxu0 0.0
    %281 = vmatpush2.msra.mxu0 %v225
    %282 = vmatprep.subr.mxu0 0.0
    %283 = vmatpush2.msra.mxu0 %v224
    %284 = vmatprep.subr.mxu0 0.0
    %285 = vmatpush2.msra.mxu0 %v223
    %286 = vmatprep.subr.mxu0 0.0
    %287 = vmatpush2.msra.mxu0 %v222
    %288 = vmatprep.subr.mxu0 0.0
    %289 = vmatpush2.msra.mxu0 %v221
    %290 = vmatprep.subr.mxu0 0.0
    %291 = vmatpush2.msra.mxu0 %v220
    %292 = vmatprep.subr.mxu0 0.0
    %293 = vmatpush2.msra.mxu0 %v219
    %294 = vmatprep.subr.mxu0 0.0
    %295 = vmatpush2.msra.mxu0 %v218
    %296 = vmatprep.subr.mxu0 0.0
    %297 = vmatpush2.msra.mxu0 %v217
    %298 = vmatprep.subr.mxu0 0.0
    %299 = vmatpush2.msra.mxu0 %v216
    %300 = vmatprep.subr.mxu0 0.0
    %301 = vmatpush2.msra.mxu0 %v215
    %302 = vmatprep.mubr.f32.mxu0 %v198
    %303 = vmatmul.mubr.f32.gmra.mxu0 %v197
    %v304 = vpop.f32.mrf.mxu0
    %v305 = vadd.f32 %v236, %v304
    %v306 = vpop.f32.mrf.mxu0
    %307 = vdwg.mxu0
    %308 = vst [vmem:[%s5] sm:$0xff] %v305
    // Predicated region
    $region30: #{two_hidden_layer_fc.1} parent=1 // pred_check
      _
    $region31: #{two_hidden_layer_fc.1} parent=1 // pred_check_branch
      %310 = sbr.rel (0) target = $region33
    $region32: #{two_hidden_layer_fc.1} parent=1 // pred_region
      _
    $region33: #{two_hidden_layer_fc.1} parent=1 // pred_fallthru
      _
    // Predicated region
    $region34: #{two_hidden_layer_fc.1} parent=1 // pred_check
      _
    $region35: #{two_hidden_layer_fc.1} parent=1 // pred_check_branch
      %312 = sbr.rel (0) target = $region37
    $region36: #{two_hidden_layer_fc.1} parent=1 // pred_region
      _
    $region37: #{two_hidden_layer_fc.1} parent=1 // pred_fallthru
      _
    %313 = vsyncpa [#allocation3], 1
    %314 = vsyncpa [#allocation5], 1

</llo_original>
